<compile_context>
chip_gen: v6e
topology: v6e:2x2x1
jax: 0.10.0
libtpu: 0.0.40
codegen_flags: <defaults>
</compile_context>

<pallas_src>
import functools

import jax
import jax.numpy as jnp
from jax.experimental import pallas as pl
from jax.experimental.pallas import tpu as pltpu

_LANE = 128      # last-dim (lane) multiple
_SUBLANE = 8     # second-to-last (sublane) multiple for f32


def _round_up(n, m):
    return ((n + m - 1) // m) * m


def _fused_mlp_kernel(*refs, num_layers):
    """refs = (x_ref, w0, b0, ..., w{L-1}, b{L-1}, o_ref).

    x_ref: [TB, IN0p] f32; wi: [INp_i, OUTp_i] (bf16/f32); bi: [1, OUTp_i] f32;
    o_ref: [TB, OUTp_last] f32.  Feature dims are pre-padded to lane multiples.
    """
    x_ref = refs[0]
    o_ref = refs[-1]
    h = x_ref[...].astype(jnp.float32)
    for i in range(num_layers):
        w = refs[1 + 2 * i][...]
        b = refs[2 + 2 * i][...].astype(jnp.float32)
        # bf16 x bf16 MXU feed, f32 accumulate; bias/ReLU epilogue on the VPU in f32.
        h = jnp.dot(h.astype(w.dtype), w, preferred_element_type=jnp.float32) + b
        if i < num_layers - 1:
            h = jnp.maximum(h, 0.0)   # ReLU between layers, not after the last
        # TODO(synk): for very wide hidden layers (out_pad >= ~2048 at tb=128),
        # chunk this layer's N inside the kernel instead of relying on tb capping.
    o_ref[...] = h.astype(o_ref.dtype)


def _choose_batch_tile(batch, feat_pads):
    """Pick a batch tile (sublane multiple) + padded batch for the tiled path."""
    max_feat = max(feat_pads)
    # Keep the live f32 activation tile tb*max_feat*4B within ~one vreg file
    # (256 KiB) so h never spills to VMEM between layers (vld/vst slot pressure).
    cap = max(_SUBLANE, ((256 * 1024) // (4 * max_feat)) // _SUBLANE * _SUBLANE)
    # v6e/v7x MXUs are 256-wide; little benefit beyond ~256 rows per tile.
    # TODO(synk): sweep this cap per generation (128 already fills M on v5e).
    cap = min(cap, 256)
    b_pad = _round_up(batch, _SUBLANE)
    # Aim for >= 2 batch tiles so dimension_semantics=("parallel",) actually
    # shards across v7x's two TensorCores.
    tb = min(cap, _round_up((b_pad + 1) // 2, _SUBLANE))
    b_pad = _round_up(b_pad, tb)
    return tb, b_pad


def fused_mlp_forward(x2d, padded_weights, padded_biases, output_size):
    """x2d: [B, input_size] f32 -> [B, output_size] f32 via one pallas_call."""
    B, F = x2d.shape
    num_layers = len(padded_weights)
    in_pad = padded_weights[0].shape[0]
    out_pad_last = padded_weights[-1].shape[1]
    feat_pads = [in_pad] + [w.shape[1] for w in padded_weights]

    if B <= _SUBLANE:
        # Tiny batch: launch/DMA-latency bound; skip the batch zero-pad entirely
        # and use full-array blocks (allowed when block_shape == array dims).
        tb, b_pad = B, B
        if F == in_pad:
            xp = x2d
        else:
            xp = jnp.zeros((B, in_pad), x2d.dtype).at[:, :F].set(x2d)
    else:
        tb, b_pad = _choose_batch_tile(B, feat_pads)
        xp = jnp.zeros((b_pad, in_pad), x2d.dtype).at[:B, :F].set(x2d)

    kernel = functools.partial(_fused_mlp_kernel, num_layers=num_layers)

    # VMEM budget: resident (single-buffered) weights + double-buffered activation
    # in/out tiles + headroom for compiler scratch.
    weight_bytes = sum(int(w.size) * w.dtype.itemsize + int(b.size) * b.dtype.itemsize
                       for w, b in zip(padded_weights, padded_biases))
    act_bytes = 2 * tb * in_pad * xp.dtype.itemsize + 2 * tb * out_pad_last * 4
    vmem_limit = weight_bytes + act_bytes + (8 << 20)
    vmem_limit = min(max(vmem_limit, 32 << 20), 100 << 20)
    # TODO(synk): if resident weights ever exceed ~56 MiB (v7x per-TC VMEM),
    # add a layer/N-tiling grid axis instead of keeping every weight resident.

    flops = 2 * b_pad * sum(w.shape[0] * w.shape[1] for w in padded_weights)
    bytes_accessed = (int(xp.size) * xp.dtype.itemsize + weight_bytes
                      + b_pad * out_pad_last * 4)
    cost = pl.CostEstimate(flops=flops, transcendentals=0,
                           bytes_accessed=bytes_accessed)

    inputs = [xp] + [a for wb in zip(padded_weights, padded_biases) for a in wb]

    def _call(single_buffer_weights):
        wkwargs = ({"pipeline_mode": pl.Buffered(1)} if single_buffer_weights else {})
        in_specs = [pl.BlockSpec((tb, in_pad), lambda i: (i, 0))]
        for w, b in zip(padded_weights, padded_biases):
            # Constant block index -> weights/bias stay resident in VMEM across
            # the whole grid; single-buffered to halve their footprint.
            in_specs.append(pl.BlockSpec(w.shape, lambda i: (0, 0), **wkwargs))
            in_specs.append(pl.BlockSpec(b.shape, lambda i: (0, 0), **wkwargs))
        return pl.pallas_call(
            kernel,
            out_shape=jax.ShapeDtypeStruct((b_pad, out_pad_last), x2d.dtype),
            grid=(b_pad // tb,),
            in_specs=in_specs,
            out_specs=pl.BlockSpec((tb, out_pad_last), lambda i: (i, 0)),
            compiler_params=pltpu.CompilerParams(
                # Batch tiles are independent -> shard across v7x's 2 TensorCores.
                dimension_semantics=("parallel",),
                vmem_limit_bytes=int(vmem_limit),
            ),
            cost_estimate=cost,
        )(*inputs)

    try:
        out = _call(single_buffer_weights=True)
    except Exception:
        # Fallback for JAX versions without single-buffer pipeline_mode support.
        out = _call(single_buffer_weights=False)
    return out[:B, :output_size]


class FlexMLPPallas:
    """JAX/Pallas equivalent of the PyTorch flexMLP forward pass."""

    def __init__(self, hidden_sizes, num_affine_layers, input_size=384,
                 output_size=6, key=None, param_dtype=jnp.bfloat16):
        if num_affine_layers < 1 or num_affine_layers > 5:
            raise ValueError("num_affine_layers must be between 1 and 5")
        if key is None:
            key = jax.random.PRNGKey(0)
        self.input_size = input_size
        self.output_size = output_size
        # bf16 weights: MXU-native on v5e/v6e/v7x and half the DMA/VMEM bytes.
        # Use jnp.float32 here if strict f32 numerics are required.
        self.param_dtype = param_dtype

        # Layer sizes, PyTorch nn.Linear-style init U(-1/sqrt(fan_in), 1/sqrt(fan_in)).
        sizes = []
        in_size = input_size
        for i in range(num_affine_layers - 1):
            sizes.append((in_size, hidden_sizes[i]))
            in_size = hidden_sizes[i]
        sizes.append((in_size, output_size))

        self.raw_params = []       # (W [out,in] f32, b [out] f32) — reference copy
        self.padded_weights = []   # [IN_pad, OUT_pad] param_dtype, pre-transposed
        self.padded_biases = []    # [1, OUT_pad] f32 (added to the f32 accumulator)
        for fan_in, fan_out in sizes:
            key, kw, kb = jax.random.split(key, 3)
            bound = 1.0 / jnp.sqrt(fan_in)
            W = jax.random.uniform(kw, (fan_out, fan_in), jnp.float32, -bound, bound)
            bvec = jax.random.uniform(kb, (fan_out,), jnp.float32, -bound, bound)
            self.raw_params.append((W, bvec))

            in_p = _round_up(fan_in, _LANE)
            out_p = _round_up(fan_out, _LANE)
            wp = (jnp.zeros((in_p, out_p), self.param_dtype)
                  .at[:fan_in, :fan_out].set(W.T.astype(self.param_dtype)))
            bp = jnp.zeros((1, out_p), jnp.float32).at[0, :fan_out].set(bvec)
            self.padded_weights.append(wp)
            self.padded_biases.append(bp)

    def __call__(self, x):
        x2d = x.reshape(x.shape[0], -1)   # x.view(x.size(0), -1)
        return fused_mlp_forward(x2d, self.padded_weights, self.padded_biases,
                                 self.output_size)


def _reference_forward(model, x):
    """Pure-JAX reference using the same weight/activation quantization as the kernel."""
    h = x.reshape(x.shape[0], -1).astype(jnp.float32)
    n = len(model.raw_params)
    for i, (W, bvec) in enumerate(model.raw_params):
        wq = W.astype(model.param_dtype).astype(jnp.float32)
        hq = h.astype(model.param_dtype).astype(jnp.float32)
        h = jnp.dot(hq, wq.T, preferred_element_type=jnp.float32) + bvec
        if i < n - 1:
            h = jnp.maximum(h, 0.0)
    return h


if __name__ == "__main__":
    key = jax.random.PRNGKey(0)
    k_in, k_in_big, k_model, k_model1 = jax.random.split(key, 4)

    # input_size=384 flattened from [batch, 6, 8, 8]; batch=2
    batch = 2
    x = jax.random.normal(k_in, (batch, 6, 8, 8), dtype=jnp.float32)

    # 3-layer MLP: 384 -> 32 -> 32 -> 6 (ReLU between layers)
    model = FlexMLPPallas(hidden_sizes=[32, 32], num_affine_layers=3,
                          input_size=384, output_size=6, key=k_model)
    out = jax.block_until_ready(model(x))
    ref = _reference_forward(model, x)
    assert out.shape == (batch, 6), out.shape
    assert jnp.allclose(out, ref, atol=1e-4, rtol=1e-4), \
        f"mismatch: max abs err {jnp.max(jnp.abs(out - ref))}"

    # Larger batch exercises the multi-tile "parallel" grid path.
    x_big = jax.random.normal(k_in_big, (32, 6, 8, 8), dtype=jnp.float32)
    out_big = jax.block_until_ready(model(x_big))
    ref_big = _reference_forward(model, x_big)
    assert out_big.shape == (32, 6), out_big.shape
    assert jnp.allclose(out_big, ref_big, atol=1e-4, rtol=1e-4), \
        f"mismatch: max abs err {jnp.max(jnp.abs(out_big - ref_big))}"

    # Single-affine-layer edge case (no ReLU at all): 384 -> 6
    model1 = FlexMLPPallas(hidden_sizes=[], num_affine_layers=1,
                           input_size=384, output_size=6, key=k_model1)
    out1 = jax.block_until_ready(model1(x))
    ref1 = _reference_forward(model1, x)
    assert out1.shape == (batch, 6), out1.shape
    assert jnp.allclose(out1, ref1, atol=1e-4, rtol=1e-4), \
        f"mismatch: max abs err {jnp.max(jnp.abs(out1 - ref1))}"

    print("KERNEL_OK")
</pallas_src>

<mosaic_0001>
module attributes {stable_mosaic.version = 11 : i64} {
  func.func @_fused_mlp_kernel(%arg0: i32, %arg1: memref<2x384xf32, #tpu.memory_space<vmem>>, %arg2: memref<384x128xbf16, #tpu.memory_space<vmem>>, %arg3: memref<1x128xf32, #tpu.memory_space<vmem>>, %arg4: memref<128x128xbf16, #tpu.memory_space<vmem>>, %arg5: memref<1x128xf32, #tpu.memory_space<vmem>>, %arg6: memref<128x128xbf16, #tpu.memory_space<vmem>>, %arg7: memref<1x128xf32, #tpu.memory_space<vmem>>, %arg8: memref<2x128xf32, #tpu.memory_space<vmem>>) attributes {dimension_semantics = [#tpu.dimension_semantics<parallel>], iteration_bounds = array<i64: 1>, scalar_prefetch = 0 : i64, scratch_operands = 0 : i64, tpu.core_type = #tpu.core_type<tc>, window_params = [{transform_indices = @transform_0, window_bounds = array<i64: 2, 384>}, {pipeline_mode = #tpu.pipeline_mode<synchronous>, transform_indices = @transform_1, window_bounds = array<i64: 384, 128>}, {pipeline_mode = #tpu.pipeline_mode<synchronous>, transform_indices = @transform_2, window_bounds = array<i64: 1, 128>}, {pipeline_mode = #tpu.pipeline_mode<synchronous>, transform_indices = @transform_3, window_bounds = array<i64: 128, 128>}, {pipeline_mode = #tpu.pipeline_mode<synchronous>, transform_indices = @transform_4, window_bounds = array<i64: 1, 128>}, {pipeline_mode = #tpu.pipeline_mode<synchronous>, transform_indices = @transform_5, window_bounds = array<i64: 128, 128>}, {pipeline_mode = #tpu.pipeline_mode<synchronous>, transform_indices = @transform_6, window_bounds = array<i64: 1, 128>}, {transform_indices = @transform_7, window_bounds = array<i64: 2, 128>}]} {
    %c0 = arith.constant 0 : index
    %c0_0 = arith.constant 0 : index
    %0 = vector.load %arg1[%c0, %c0_0] : memref<2x384xf32, #tpu.memory_space<vmem>>, vector<2x384xf32>
    %c0_1 = arith.constant 0 : index
    %c0_2 = arith.constant 0 : index
    %1 = vector.load %arg2[%c0_1, %c0_2] : memref<384x128xbf16, #tpu.memory_space<vmem>>, vector<384x128xbf16>
    %c0_3 = arith.constant 0 : index
    %c0_4 = arith.constant 0 : index
    %2 = vector.load %arg3[%c0_3, %c0_4] : memref<1x128xf32, #tpu.memory_space<vmem>>, vector<1x128xf32>
    %3 = arith.truncf %0 : vector<2x384xf32> to vector<2x384xbf16>
    %cst = arith.constant dense<0.000000e+00> : vector<2x128xf32>
    %4 = tpu.matmul %3, %1, %cst {dimension_numbers = #tpu.dot_dimension_numbers<[1], [0], [0], [1], [0, 0, 1, 1], [], []>} : vector<2x384xbf16>, vector<384x128xbf16>, vector<2x128xf32> -> vector<2x128xf32>
    %5 = vector.broadcast %2 : vector<1x128xf32> to vector<2x128xf32>
    %6 = arith.addf %4, %5 : vector<2x128xf32>
    %cst_5 = arith.constant 0.000000e+00 : f32
    %7 = vector.broadcast %cst_5 : f32 to vector<2x128xf32>
    %8 = arith.maximumf %6, %7 : vector<2x128xf32>
    %c0_6 = arith.constant 0 : index
    %c0_7 = arith.constant 0 : index
    %9 = vector.load %arg4[%c0_6, %c0_7] : memref<128x128xbf16, #tpu.memory_space<vmem>>, vector<128x128xbf16>
    %c0_8 = arith.constant 0 : index
    %c0_9 = arith.constant 0 : index
    %10 = vector.load %arg5[%c0_8, %c0_9] : memref<1x128xf32, #tpu.memory_space<vmem>>, vector<1x128xf32>
    %11 = arith.truncf %8 : vector<2x128xf32> to vector<2x128xbf16>
    %cst_10 = arith.constant dense<0.000000e+00> : vector<2x128xf32>
    %12 = tpu.matmul %11, %9, %cst_10 {dimension_numbers = #tpu.dot_dimension_numbers<[1], [0], [0], [1], [0, 0, 1, 1], [], []>} : vector<2x128xbf16>, vector<128x128xbf16>, vector<2x128xf32> -> vector<2x128xf32>
    %13 = vector.broadcast %10 : vector<1x128xf32> to vector<2x128xf32>
    %14 = arith.addf %12, %13 : vector<2x128xf32>
    %cst_11 = arith.constant 0.000000e+00 : f32
    %15 = vector.broadcast %cst_11 : f32 to vector<2x128xf32>
    %16 = arith.maximumf %14, %15 : vector<2x128xf32>
    %c0_12 = arith.constant 0 : index
    %c0_13 = arith.constant 0 : index
    %17 = vector.load %arg6[%c0_12, %c0_13] : memref<128x128xbf16, #tpu.memory_space<vmem>>, vector<128x128xbf16>
    %c0_14 = arith.constant 0 : index
    %c0_15 = arith.constant 0 : index
    %18 = vector.load %arg7[%c0_14, %c0_15] : memref<1x128xf32, #tpu.memory_space<vmem>>, vector<1x128xf32>
    %19 = arith.truncf %16 : vector<2x128xf32> to vector<2x128xbf16>
    %cst_16 = arith.constant dense<0.000000e+00> : vector<2x128xf32>
    %20 = tpu.matmul %19, %17, %cst_16 {dimension_numbers = #tpu.dot_dimension_numbers<[1], [0], [0], [1], [0, 0, 1, 1], [], []>} : vector<2x128xbf16>, vector<128x128xbf16>, vector<2x128xf32> -> vector<2x128xf32>
    %21 = vector.broadcast %18 : vector<1x128xf32> to vector<2x128xf32>
    %22 = arith.addf %20, %21 : vector<2x128xf32>
    %c0_17 = arith.constant 0 : index
    %c0_18 = arith.constant 0 : index
    %23 = vector.load %arg8[%c0_17, %c0_18] : memref<2x128xf32, #tpu.memory_space<vmem>>, vector<2x128xf32>
    tpu.vector_store %arg8[%c0_17, %c0_18], %22 {strides = array<i32>} : memref<2x128xf32, #tpu.memory_space<vmem>>, vector<2x128xf32>,
    return
  }
  func.func @transform_0(%arg0: i32) -> (i32, i32) {
    %c0_i32 = arith.constant 0 : i32
    %c0_i32_0 = arith.constant 0 : i32
    return %arg0, %c0_i32 : i32, i32
  }
  func.func @transform_1(%arg0: i32) -> (i32, i32) {
    %c0_i32 = arith.constant 0 : i32
    %c0_i32_0 = arith.constant 0 : i32
    %c0_i32_1 = arith.constant 0 : i32
    return %c0_i32, %c0_i32_0 : i32, i32
  }
  func.func @transform_2(%arg0: i32) -> (i32, i32) {
    %c0_i32 = arith.constant 0 : i32
    %c0_i32_0 = arith.constant 0 : i32
    %c0_i32_1 = arith.constant 0 : i32
    return %c0_i32, %c0_i32_0 : i32, i32
  }
  func.func @transform_3(%arg0: i32) -> (i32, i32) {
    %c0_i32 = arith.constant 0 : i32
    %c0_i32_0 = arith.constant 0 : i32
    %c0_i32_1 = arith.constant 0 : i32
    return %c0_i32, %c0_i32_0 : i32, i32
  }
  func.func @transform_4(%arg0: i32) -> (i32, i32) {
    %c0_i32 = arith.constant 0 : i32
    %c0_i32_0 = arith.constant 0 : i32
    %c0_i32_1 = arith.constant 0 : i32
    return %c0_i32, %c0_i32_0 : i32, i32
  }
  func.func @transform_5(%arg0: i32) -> (i32, i32) {
    %c0_i32 = arith.constant 0 : i32
    %c0_i32_0 = arith.constant 0 : i32
    %c0_i32_1 = arith.constant 0 : i32
    return %c0_i32, %c0_i32_0 : i32, i32
  }
  func.func @transform_6(%arg0: i32) -> (i32, i32) {
    %c0_i32 = arith.constant 0 : i32
    %c0_i32_0 = arith.constant 0 : i32
    %c0_i32_1 = arith.constant 0 : i32
    return %c0_i32, %c0_i32_0 : i32, i32
  }
  func.func @transform_7(%arg0: i32) -> (i32, i32) {
    %c0_i32 = arith.constant 0 : i32
    %c0_i32_0 = arith.constant 0 : i32
    return %arg0, %c0_i32 : i32, i32
  }
}

module attributes {stable_mosaic.version = 11 : i64} {
  func.func @_fused_mlp_kernel(%arg0: i32, %arg1: memref<2x384xf32, #tpu.memory_space<vmem>>, %arg2: memref<384x128xbf16, #tpu.memory_space<vmem>>, %arg3: memref<1x128xf32, #tpu.memory_space<vmem>>, %arg4: memref<128x128xbf16, #tpu.memory_space<vmem>>, %arg5: memref<1x128xf32, #tpu.memory_space<vmem>>, %arg6: memref<128x128xbf16, #tpu.memory_space<vmem>>, %arg7: memref<1x128xf32, #tpu.memory_space<vmem>>, %arg8: memref<2x128xf32, #tpu.memory_space<vmem>>) attributes {dimension_semantics = [#tpu.dimension_semantics<parallel>], iteration_bounds = array<i64: 1>, scalar_prefetch = 0 : i64, scratch_operands = 0 : i64, tpu.core_type = #tpu.core_type<tc>, window_params = [{transform_indices = @transform_0, window_bounds = array<i64: 2, 384>}, {pipeline_mode = #tpu.pipeline_mode<synchronous>, transform_indices = @transform_1, window_bounds = array<i64: 384, 128>}, {pipeline_mode = #tpu.pipeline_mode<synchronous>, transform_indices = @transform_2, window_bounds = array<i64: 1, 128>}, {pipeline_mode = #tpu.pipeline_mode<synchronous>, transform_indices = @transform_3, window_bounds = array<i64: 128, 128>}, {pipeline_mode = #tpu.pipeline_mode<synchronous>, transform_indices = @transform_4, window_bounds = array<i64: 1, 128>}, {pipeline_mode = #tpu.pipeline_mode<synchronous>, transform_indices = @transform_5, window_bounds = array<i64: 128, 128>}, {pipeline_mode = #tpu.pipeline_mode<synchronous>, transform_indices = @transform_6, window_bounds = array<i64: 1, 128>}, {transform_indices = @transform_7, window_bounds = array<i64: 2, 128>}]} {
    %c0 = arith.constant 0 : index
    %c0_0 = arith.constant 0 : index
    %0 = vector.load %arg1[%c0, %c0_0] : memref<2x384xf32, #tpu.memory_space<vmem>>, vector<2x384xf32>
    %c0_1 = arith.constant 0 : index
    %c0_2 = arith.constant 0 : index
    %1 = vector.load %arg2[%c0_1, %c0_2] : memref<384x128xbf16, #tpu.memory_space<vmem>>, vector<384x128xbf16>
    %c0_3 = arith.constant 0 : index
    %c0_4 = arith.constant 0 : index
    %2 = vector.load %arg3[%c0_3, %c0_4] : memref<1x128xf32, #tpu.memory_space<vmem>>, vector<1x128xf32>
    %3 = arith.truncf %0 : vector<2x384xf32> to vector<2x384xbf16>
    %cst = arith.constant dense<0.000000e+00> : vector<2x128xf32>
    %4 = tpu.matmul %3, %1, %cst {dimension_numbers = #tpu.dot_dimension_numbers<[1], [0], [0], [1], [0, 0, 1, 1], [], []>} : vector<2x384xbf16>, vector<384x128xbf16>, vector<2x128xf32> -> vector<2x128xf32>
    %5 = vector.broadcast %2 : vector<1x128xf32> to vector<2x128xf32>
    %6 = arith.addf %4, %5 : vector<2x128xf32>
    %cst_5 = arith.constant 0.000000e+00 : f32
    %7 = vector.broadcast %cst_5 : f32 to vector<2x128xf32>
    %8 = arith.maximumf %6, %7 : vector<2x128xf32>
    %c0_6 = arith.constant 0 : index
    %c0_7 = arith.constant 0 : index
    %9 = vector.load %arg4[%c0_6, %c0_7] : memref<128x128xbf16, #tpu.memory_space<vmem>>, vector<128x128xbf16>
    %c0_8 = arith.constant 0 : index
    %c0_9 = arith.constant 0 : index
    %10 = vector.load %arg5[%c0_8, %c0_9] : memref<1x128xf32, #tpu.memory_space<vmem>>, vector<1x128xf32>
    %11 = arith.truncf %8 : vector<2x128xf32> to vector<2x128xbf16>
    %cst_10 = arith.constant dense<0.000000e+00> : vector<2x128xf32>
    %12 = tpu.matmul %11, %9, %cst_10 {dimension_numbers = #tpu.dot_dimension_numbers<[1], [0], [0], [1], [0, 0, 1, 1], [], []>} : vector<2x128xbf16>, vector<128x128xbf16>, vector<2x128xf32> -> vector<2x128xf32>
    %13 = vector.broadcast %10 : vector<1x128xf32> to vector<2x128xf32>
    %14 = arith.addf %12, %13 : vector<2x128xf32>
    %cst_11 = arith.constant 0.000000e+00 : f32
    %15 = vector.broadcast %cst_11 : f32 to vector<2x128xf32>
    %16 = arith.maximumf %14, %15 : vector<2x128xf32>
    %c0_12 = arith.constant 0 : index
    %c0_13 = arith.constant 0 : index
    %17 = vector.load %arg6[%c0_12, %c0_13] : memref<128x128xbf16, #tpu.memory_space<vmem>>, vector<128x128xbf16>
    %c0_14 = arith.constant 0 : index
    %c0_15 = arith.constant 0 : index
    %18 = vector.load %arg7[%c0_14, %c0_15] : memref<1x128xf32, #tpu.memory_space<vmem>>, vector<1x128xf32>
    %19 = arith.truncf %16 : vector<2x128xf32> to vector<2x128xbf16>
    %cst_16 = arith.constant dense<0.000000e+00> : vector<2x128xf32>
    %20 = tpu.matmul %19, %17, %cst_16 {dimension_numbers = #tpu.dot_dimension_numbers<[1], [0], [0], [1], [0, 0, 1, 1], [], []>} : vector<2x128xbf16>, vector<128x128xbf16>, vector<2x128xf32> -> vector<2x128xf32>
    %21 = vector.broadcast %18 : vector<1x128xf32> to vector<2x128xf32>
    %22 = arith.addf %20, %21 : vector<2x128xf32>
    %c0_17 = arith.constant 0 : index
    %c0_18 = arith.constant 0 : index
    %23 = vector.load %arg8[%c0_17, %c0_18] : memref<2x128xf32, #tpu.memory_space<vmem>>, vector<2x128xf32>
    tpu.vector_store %arg8[%c0_17, %c0_18], %22 {strides = array<i32>} : memref<2x128xf32, #tpu.memory_space<vmem>>, vector<2x128xf32>,
    return
  }
  func.func @transform_0(%arg0: i32) -> (i32, i32) {
    %c0_i32 = arith.constant 0 : i32
    %c0_i32_0 = arith.constant 0 : i32
    return %arg0, %c0_i32 : i32, i32
  }
  func.func @transform_1(%arg0: i32) -> (i32, i32) {
    %c0_i32 = arith.constant 0 : i32
    %c0_i32_0 = arith.constant 0 : i32
    %c0_i32_1 = arith.constant 0 : i32
    return %c0_i32, %c0_i32_0 : i32, i32
  }
  func.func @transform_2(%arg0: i32) -> (i32, i32) {
    %c0_i32 = arith.constant 0 : i32
    %c0_i32_0 = arith.constant 0 : i32
    %c0_i32_1 = arith.constant 0 : i32
    return %c0_i32, %c0_i32_0 : i32, i32
  }
  func.func @transform_3(%arg0: i32) -> (i32, i32) {
    %c0_i32 = arith.constant 0 : i32
    %c0_i32_0 = arith.constant 0 : i32
    %c0_i32_1 = arith.constant 0 : i32
    return %c0_i32, %c0_i32_0 : i32, i32
  }
  func.func @transform_4(%arg0: i32) -> (i32, i32) {
    %c0_i32 = arith.constant 0 : i32
    %c0_i32_0 = arith.constant 0 : i32
    %c0_i32_1 = arith.constant 0 : i32
    return %c0_i32, %c0_i32_0 : i32, i32
  }
  func.func @transform_5(%arg0: i32) -> (i32, i32) {
    %c0_i32 = arith.constant 0 : i32
    %c0_i32_0 = arith.constant 0 : i32
    %c0_i32_1 = arith.constant 0 : i32
    return %c0_i32, %c0_i32_0 : i32, i32
  }
  func.func @transform_6(%arg0: i32) -> (i32, i32) {
    %c0_i32 = arith.constant 0 : i32
    %c0_i32_0 = arith.constant 0 : i32
    %c0_i32_1 = arith.constant 0 : i32
    return %c0_i32, %c0_i32_0 : i32, i32
  }
  func.func @transform_7(%arg0: i32) -> (i32, i32) {
    %c0_i32 = arith.constant 0 : i32
    %c0_i32_0 = arith.constant 0 : i32
    return %arg0, %c0_i32 : i32, i32
  }
}

</mosaic_0001>

<llo_original>
// kernel: tpu_custom_call.1
$region0: #{tpu_custom_call.1}
  #allocation0 [shape = 'u32[]', space=smem, size = 0x4, offset = 0x4, fixed_abs, tag = 'smem constant byte address 0x4 - core index']
  #allocation1 [shape = 'u32[144,128]{1,0:T(1,128)}', space=vmem, size = 0x12000, scoped, tag = 'internal scratch']
  %s0 = inlined_call_operand.hbm [shape: f32[2,384], index: 0, kind: input, shape index: {}]
  %s1 = inlined_call_operand.hbm [shape: bf16[384,128], index: 1, kind: input, shape index: {}]
  %s2 = inlined_call_operand.vmem [shape: f32[1,128], index: 2, kind: input, shape index: {}]
  %s3 = inlined_call_operand.hbm [shape: bf16[128,128], index: 3, kind: input, shape index: {}]
  %s4 = inlined_call_operand.vmem [shape: f32[1,128], index: 4, kind: input, shape index: {}]
  %s5 = inlined_call_operand.hbm [shape: bf16[128,128], index: 5, kind: input, shape index: {}]
  %s6 = inlined_call_operand.vmem [shape: f32[1,128], index: 6, kind: input, shape index: {}]
  %s7 = inlined_call_operand.hbm [shape: f32[2,128], index: 7, kind: output, shape index: {}]
  %s8 = sld [smem:[#allocation0]]
  $region54: #{tpu_custom_call.1} parent=0
    _
  %s10 = ssub.s32 1, %s8
  %s11 = scalar_select 0, %s10, %s8
  $region1: #{tpu_custom_call.1} parent=0
    #allocation2 [shape = 'u8[3072]{0}', space=vmem, size = 0xc00, scoped, tag = 'input window, operand 0, single buffered']
    #allocation3 [shape = 's32[1]{0}', space=sflag, size = 0x4, scoped, tag = 'scoped memory for tpu_custom_call.1']
    #allocation4 [shape = 's32[1]{0}', space=sflag, size = 0x4, scoped, tag = 'scoped memory for tpu_custom_call.1']
    #allocation5 [shape = 'u8[98304]{0}', space=vmem, size = 0x18000, scoped, tag = 'input window, operand 1, single buffered']
    #allocation6 [shape = 's32[1]{0}', space=sflag, size = 0x4, scoped, tag = 'scoped memory for tpu_custom_call.1']
    #allocation7 [shape = 'u8[32768]{0}', space=vmem, size = 0x8000, scoped, tag = 'input window, operand 3, single buffered']
    #allocation8 [shape = 'u8[32768]{0}', space=vmem, size = 0x8000, scoped, tag = 'input window, operand 5, single buffered']
    #allocation9 [shape = 's32[1]{0}', space=sflag, size = 0x4, scoped, tag = 'scoped memory for tpu_custom_call.1']
    #allocation10 [shape = 'u8[1024]{0}', space=vmem, size = 0x400, scoped, tag = 'output window, operand 0, single buffered']
    %12 = vsyncpa [#allocation3], 0
    %13 = vsyncpa [#allocation6], 0
    %14 = vsyncpa [#allocation9], 0
    %15 = vsyncpa [#allocation4], 0
    // Predicated region
    $region2: #{tpu_custom_call.1} parent=1 // pred_check
      _
    $region3: #{tpu_custom_call.1} parent=1 // pred_check_branch
      %17 = sbr.rel (0) target = $region5
    $region4: #{tpu_custom_call.1} parent=1 // pred_region
      %s19 = ssub.s32 96, 96
      %20 = vsyncadd [#allocation3], %s19
      %s22 = sshll.u32 [#allocation2], 4
      %s23 = int_to_ptr.vmem [resolvable:$true] %s22
      %25 = dma.hbm_to_vmem [thread:$0]  %s0, 96, %s23, [#allocation3]
    $region5: #{tpu_custom_call.1} parent=1 // pred_fallthru
      _
    // Predicated region
    $region6: #{tpu_custom_call.1} parent=1 // pred_check
      _
    $region7: #{tpu_custom_call.1} parent=1 // pred_check_branch
      %27 = sbr.rel (0) target = $region9
    $region8: #{tpu_custom_call.1} parent=1 // pred_region
      %s29 = ssub.s32 3072, 3072
      %30 = vsyncadd [#allocation6], %s29
      %s31 = sshll.u32 [#allocation5], 4
      %s32 = int_to_ptr.vmem [resolvable:$true] %s31
      %37 = dma.hbm_to_vmem [thread:$0]  %s1, 3072, %s32, [#allocation6], 64, 64, 4
    $region9: #{tpu_custom_call.1} parent=1 // pred_fallthru
      _
    // Predicated region
    $region10: #{tpu_custom_call.1} parent=1 // pred_check
      _
    $region11: #{tpu_custom_call.1} parent=1 // pred_check_branch
      %39 = sbr.rel (0) target = $region13
    $region12: #{tpu_custom_call.1} parent=1 // pred_region
      _
    $region13: #{tpu_custom_call.1} parent=1 // pred_fallthru
      _
    // Predicated region
    $region14: #{tpu_custom_call.1} parent=1 // pred_check
      _
    $region15: #{tpu_custom_call.1} parent=1 // pred_check_branch
      %41 = sbr.rel (0) target = $region17
    $region16: #{tpu_custom_call.1} parent=1 // pred_region
      %s43 = ssub.s32 1024, 1024
      %44 = vsyncadd [#allocation6], %s43
      %s45 = sshll.u32 [#allocation7], 4
      %s46 = int_to_ptr.vmem [resolvable:$true] %s45
      %51 = dma.hbm_to_vmem [thread:$0]  %s3, 1024, %s46, [#allocation6], 64, 64, 4
    $region17: #{tpu_custom_call.1} parent=1 // pred_fallthru
      _
    // Predicated region
    $region18: #{tpu_custom_call.1} parent=1 // pred_check
      _
    $region19: #{tpu_custom_call.1} parent=1 // pred_check_branch
      %53 = sbr.rel (0) target = $region21
    $region20: #{tpu_custom_call.1} parent=1 // pred_region
      _
    $region21: #{tpu_custom_call.1} parent=1 // pred_fallthru
      _
    // Predicated region
    $region22: #{tpu_custom_call.1} parent=1 // pred_check
      _
    $region23: #{tpu_custom_call.1} parent=1 // pred_check_branch
      %55 = sbr.rel (0) target = $region25
    $region24: #{tpu_custom_call.1} parent=1 // pred_region
      %s57 = ssub.s32 1024, 1024
      %58 = vsyncadd [#allocation9], %s57
      %s59 = sshll.u32 [#allocation8], 4
      %s60 = int_to_ptr.vmem [resolvable:$true] %s59
      %65 = dma.hbm_to_vmem [thread:$0]  %s5, 1024, %s60, [#allocation9], 64, 64, 4
    $region25: #{tpu_custom_call.1} parent=1 // pred_fallthru
      _
    // Predicated region
    $region26: #{tpu_custom_call.1} parent=1 // pred_check
      _
    $region27: #{tpu_custom_call.1} parent=1 // pred_check_branch
      %67 = sbr.rel (0) target = $region29
    $region28: #{tpu_custom_call.1} parent=1 // pred_region
      _
    $region29: #{tpu_custom_call.1} parent=1 // pred_fallthru
      _
    // Predicated region
    $region30: #{tpu_custom_call.1} parent=1 // pred_check
      _
    $region31: #{tpu_custom_call.1} parent=1 // pred_check_branch
      %69 = sbr.rel (0) target = $region33
    $region32: #{tpu_custom_call.1} parent=1 // pred_region
      %70 = dma.done [#allocation3], 96
    $region33: #{tpu_custom_call.1} parent=1 // pred_fallthru
      _
    // Predicated region
    $region34: #{tpu_custom_call.1} parent=1 // pred_check
      _
    $region35: #{tpu_custom_call.1} parent=1 // pred_check_branch
      %72 = sbr.rel (0) target = $region37
    $region36: #{tpu_custom_call.1} parent=1 // pred_region
      %73 = dma.done [#allocation6], 3072
    $region37: #{tpu_custom_call.1} parent=1 // pred_fallthru
      _
    // Predicated region
    $region38: #{tpu_custom_call.1} parent=1 // pred_check
      _
    $region39: #{tpu_custom_call.1} parent=1 // pred_check_branch
      %75 = sbr.rel (0) target = $region41
    $region40: #{tpu_custom_call.1} parent=1 // pred_region
      %76 = dma.done [#allocation6], 1024
    $region41: #{tpu_custom_call.1} parent=1 // pred_fallthru
      _
    // Predicated region
    $region42: #{tpu_custom_call.1} parent=1 // pred_check
      _
    $region43: #{tpu_custom_call.1} parent=1 // pred_check_branch
      %78 = sbr.rel (0) target = $region45
    $region44: #{tpu_custom_call.1} parent=1 // pred_region
      %79 = dma.done [#allocation9], 1024
    $region45: #{tpu_custom_call.1} parent=1 // pred_fallthru
      _
    %v81 = vld [vmem:[#allocation2] sm:$0x3f]
    %v82 = vld [vmem:[#allocation5] sm:$0xf]
    %v83 = vld [vmem:[#allocation5 + $0x4] sm:$0xf]
    %v84 = vld [vmem:[#allocation5 + $0x8] sm:$0xf]
    %v85 = vld [vmem:[#allocation5 + $0xc] sm:$0xf]
    %v86 = vld [vmem:[#allocation5 + $0x10] sm:$0xf]
    %v87 = vld [vmem:[#allocation5 + $0x14] sm:$0xf]
    %v88 = vld [vmem:[#allocation5 + $0x18] sm:$0xf]
    %v89 = vld [vmem:[#allocation5 + $0x1c] sm:$0xf]
    %v90 = vld [vmem:[#allocation5 + $0x20] sm:$0xf]
    %v91 = vld [vmem:[#allocation5 + $0x24] sm:$0xf]
    %v92 = vld [vmem:[#allocation5 + $0x28] sm:$0xf]
    %v93 = vld [vmem:[#allocation5 + $0x2c] sm:$0xf]
    %v94 = vld [vmem:[#allocation5 + $0x30] sm:$0xf]
    %v95 = vld [vmem:[#allocation5 + $0x34] sm:$0xf]
    %v96 = vld [vmem:[#allocation5 + $0x38] sm:$0xf]
    %v97 = vld [vmem:[#allocation5 + $0x3c] sm:$0xf]
    %v98 = vld [vmem:[#allocation5 + $0x40] sm:$0xf]
    %v99 = vld [vmem:[#allocation5 + $0x44] sm:$0xf]
    %v100 = vld [vmem:[#allocation5 + $0x48] sm:$0xf]
    %v101 = vld [vmem:[#allocation5 + $0x4c] sm:$0xf]
    %v102 = vld [vmem:[#allocation5 + $0x50] sm:$0xf]
    %v103 = vld [vmem:[#allocation5 + $0x54] sm:$0xf]
    %v104 = vld [vmem:[#allocation5 + $0x58] sm:$0xf]
    %v105 = vld [vmem:[#allocation5 + $0x5c] sm:$0xf]
    %v106 = vld [vmem:[#allocation5 + $0x60] sm:$0xf]
    %v107 = vld [vmem:[#allocation5 + $0x64] sm:$0xf]
    %v108 = vld [vmem:[#allocation5 + $0x68] sm:$0xf]
    %v109 = vld [vmem:[#allocation5 + $0x6c] sm:$0xf]
    %v110 = vld [vmem:[#allocation5 + $0x70] sm:$0xf]
    %v111 = vld [vmem:[#allocation5 + $0x74] sm:$0xf]
    %v112 = vld [vmem:[#allocation5 + $0x78] sm:$0xf]
    %v113 = vld [vmem:[#allocation5 + $0x7c] sm:$0xf]
    %v114 = vld [vmem:[#allocation5 + $0x80] sm:$0xf]
    %v115 = vld [vmem:[#allocation5 + $0x84] sm:$0xf]
    %v116 = vld [vmem:[#allocation5 + $0x88] sm:$0xf]
    %v117 = vld [vmem:[#allocation5 + $0x8c] sm:$0xf]
    %v118 = vld [vmem:[#allocation5 + $0x90] sm:$0xf]
    %v119 = vld [vmem:[#allocation5 + $0x94] sm:$0xf]
    %v120 = vld [vmem:[#allocation5 + $0x98] sm:$0xf]
    %v121 = vld [vmem:[#allocation5 + $0x9c] sm:$0xf]
    %v122 = vld [vmem:[#allocation5 + $0xa0] sm:$0xf]
    %v123 = vld [vmem:[#allocation5 + $0xa4] sm:$0xf]
    %v124 = vld [vmem:[#allocation5 + $0xa8] sm:$0xf]
    %v125 = vld [vmem:[#allocation5 + $0xac] sm:$0xf]
    %v126 = vld [vmem:[#allocation5 + $0xb0] sm:$0xf]
    %v127 = vld [vmem:[#allocation5 + $0xb4] sm:$0xf]
    %v128 = vld [vmem:[#allocation5 + $0xb8] sm:$0xf]
    %v129 = vld [vmem:[#allocation5 + $0xbc] sm:$0xf]
    %v130 = vld [vmem:[%s2] sm:$0x1]
    %v132 = vcombine.high %v81, %v81
    %v134 = vunpack.c.l.s4 1983009808
    %v135 = vunpack.c.0.s8 %v134
    %v136 = vlaneseq
    %v137 = vshrl.u32 %v136, 7
    %v138 = vsub.s32 %v135, %v137
    %v139 = vrot.slane %v81, %v138
    %v141 = vunpack.c.l.s4 1983009808
    %v142 = vunpack.c.0.s8 %v141
    %v143 = vlaneseq
    %v144 = vshrl.u32 %v143, 7
    %v145 = vsub.s32 %v142, %v144
    %v146 = vrot.slane %v132, %v145
    %v147 = vcombine.high %v139, %v139
    %v151 = vpack.c.bf16 %v139, %v139
    %v152 = vpack.c.bf16 %v147, %v147
    %v153 = vpack.c.bf16 %v146, %v146
    %v155 = vlaneseq
    %v156 = vshrl.u32 %v155, 7
    %v157 = vsub.s32 0, %v156
    %v158 = vrot.slane %v130, %v157
    %v208 = vunpack.c.l.b16 %v82
    %v209 = vunpack.c.l.b16 %v83
    %v210 = vunpack.c.l.b16 %v84
    %v211 = vunpack.c.l.b16 %v85
    %v212 = vunpack.c.l.b16 %v86
    %v213 = vunpack.c.l.b16 %v87
    %v214 = vunpack.c.l.b16 %v88
    %v215 = vunpack.c.l.b16 %v89
    %v216 = vunpack.c.l.b16 %v90
    %v217 = vunpack.c.l.b16 %v91
    %v218 = vunpack.c.l.b16 %v92
    %v219 = vunpack.c.l.b16 %v93
    %v220 = vunpack.c.l.b16 %v94
    %v221 = vunpack.c.l.b16 %v95
    %v222 = vunpack.c.l.b16 %v96
    %v223 = vunpack.c.l.b16 %v97
    %v224 = vunpack.c.l.b16 %v98
    %v225 = vunpack.c.l.b16 %v99
    %v226 = vunpack.c.l.b16 %v100
    %v227 = vunpack.c.l.b16 %v101
    %v228 = vunpack.c.l.b16 %v102
    %v229 = vunpack.c.l.b16 %v103
    %v230 = vunpack.c.l.b16 %v104
    %v231 = vunpack.c.l.b16 %v105
    %v232 = vunpack.c.l.b16 %v106
    %v233 = vunpack.c.l.b16 %v107
    %v234 = vunpack.c.l.b16 %v108
    %v235 = vunpack.c.l.b16 %v109
    %v236 = vunpack.c.l.b16 %v110
    %v237 = vunpack.c.l.b16 %v111
    %v238 = vunpack.c.l.b16 %v112
    %v239 = vunpack.c.l.b16 %v113
    %v240 = vunpack.c.l.b16 %v114
    %v241 = vunpack.c.l.b16 %v115
    %v242 = vunpack.c.l.b16 %v116
    %v243 = vunpack.c.l.b16 %v117
    %v244 = vunpack.c.l.b16 %v118
    %v245 = vunpack.c.l.b16 %v119
    %v246 = vunpack.c.l.b16 %v120
    %v247 = vunpack.c.l.b16 %v121
    %v248 = vunpack.c.l.b16 %v122
    %v249 = vunpack.c.l.b16 %v123
    %v250 = vunpack.c.l.b16 %v124
    %v251 = vunpack.c.l.b16 %v125
    %v252 = vunpack.c.l.b16 %v126
    %v253 = vunpack.c.l.b16 %v127
    %v254 = vunpack.c.l.b16 %v128
    %v255 = vunpack.c.l.b16 %v129
    %v256 = vpack.c.b16 %v209, %v208
    %v257 = vpack.c.b16 %v211, %v210
    %v258 = vpack.c.b16 %v213, %v212
    %v259 = vpack.c.b16 %v215, %v214
    %v260 = vpack.c.b16 %v217, %v216
    %v261 = vpack.c.b16 %v219, %v218
    %v262 = vpack.c.b16 %v221, %v220
    %v263 = vpack.c.b16 %v223, %v222
    %v264 = vpack.c.b16 %v225, %v224
    %v265 = vpack.c.b16 %v227, %v226
    %v266 = vpack.c.b16 %v229, %v228
    %v267 = vpack.c.b16 %v231, %v230
    %v268 = vpack.c.b16 %v233, %v232
    %v269 = vpack.c.b16 %v235, %v234
    %v270 = vpack.c.b16 %v237, %v236
    %v271 = vpack.c.b16 %v239, %v238
    %v272 = vpack.c.b16 %v241, %v240
    %v273 = vpack.c.b16 %v243, %v242
    %v274 = vpack.c.b16 %v245, %v244
    %v275 = vpack.c.b16 %v247, %v246
    %v276 = vpack.c.b16 %v249, %v248
    %v277 = vpack.c.b16 %v251, %v250
    %v278 = vpack.c.b16 %v253, %v252
    %v279 = vpack.c.b16 %v255, %v254
    %304 = vmatprep.subr.bf16.mxu0 0
    %305 = vmatpush1.bf16.msra.mxu0 %v263
    %306 = vmatprep.subr.bf16.mxu0 0
    %307 = vmatpush1.bf16.msra.mxu0 %v262
    %308 = vmatprep.subr.bf16.mxu0 0
    %309 = vmatpush1.bf16.msra.mxu0 %v261
    %310 = vmatprep.subr.bf16.mxu0 0
    %311 = vmatpush1.bf16.msra.mxu0 %v260
    %312 = vmatprep.subr.bf16.mxu0 0
    %313 = vmatpush1.bf16.msra.mxu0 %v259
    %314 = vmatprep.subr.bf16.mxu0 0
    %315 = vmatpush1.bf16.msra.mxu0 %v258
    %316 = vmatprep.subr.bf16.mxu0 0
    %317 = vmatpush1.bf16.msra.mxu0 %v257
    %318 = vmatprep.subr.bf16.mxu0 0
    %319 = vmatpush1.bf16.msra.mxu0 %v256
    %320 = vmatprep.subr.bf16.mxu0 0
    %321 = vmatpush2.bf16.msra.mxu0 %v271
    %322 = vmatprep.subr.bf16.mxu0 0
    %323 = vmatpush2.bf16.msra.mxu0 %v270
    %324 = vmatprep.subr.bf16.mxu0 0
    %325 = vmatpush2.bf16.msra.mxu0 %v269
    %326 = vmatprep.subr.bf16.mxu0 0
    %327 = vmatpush2.bf16.msra.mxu0 %v268
    %328 = vmatprep.subr.bf16.mxu0 0
    %329 = vmatpush2.bf16.msra.mxu0 %v267
    %330 = vmatprep.subr.bf16.mxu0 0
    %331 = vmatpush2.bf16.msra.mxu0 %v266
    %332 = vmatprep.subr.bf16.mxu0 0
    %333 = vmatpush2.bf16.msra.mxu0 %v265
    %334 = vmatprep.subr.bf16.mxu0 0
    %335 = vmatpush2.bf16.msra.mxu0 %v264
    %336 = vmatprep.mubr.bf16.mxu0 %v152
    %337 = vmatmul.mubr.bf16.gmra.mxu0 %v151
    %v338 = vpop.f32.mrf.mxu0
    %v339 = vadd.f32 %v158, %v338
    %v340 = vpop.f32.mrf.mxu0
    %v341 = vpop.f32.mrf.mxu0
    %v342 = vpop.f32.mrf.mxu0
    %343 = vdwg.mxu0
    %344 = vmatprep.subr.bf16.mxu0 0
    %345 = vmatpush1.bf16.msra.mxu0 %v279
    %346 = vmatprep.subr.bf16.mxu0 0
    %347 = vmatpush1.bf16.msra.mxu0 %v278
    %348 = vmatprep.subr.bf16.mxu0 0
    %349 = vmatpush1.bf16.msra.mxu0 %v277
    %350 = vmatprep.subr.bf16.mxu0 0
    %351 = vmatpush1.bf16.msra.mxu0 %v276
    %352 = vmatprep.subr.bf16.mxu0 0
    %353 = vmatpush1.bf16.msra.mxu0 %v275
    %354 = vmatprep.subr.bf16.mxu0 0
    %355 = vmatpush1.bf16.msra.mxu0 %v274
    %356 = vmatprep.subr.bf16.mxu0 0
    %357 = vmatpush1.bf16.msra.mxu0 %v273
    %358 = vmatprep.subr.bf16.mxu0 0
    %359 = vmatpush1.bf16.msra.mxu0 %v272
    %360 = vmatprep.subr.bf16.mxu0 0
    %361 = vmatpush2.bf16.msra.mxu0 0
    %362 = vmatprep.subr.bf16.mxu0 0
    %363 = vmatpush2.bf16.msra.mxu0 0
    %364 = vmatprep.subr.bf16.mxu0 0
    %365 = vmatpush2.bf16.msra.mxu0 0
    %366 = vmatprep.subr.bf16.mxu0 0
    %367 = vmatpush2.bf16.msra.mxu0 0
    %368 = vmatprep.subr.bf16.mxu0 0
    %369 = vmatpush2.bf16.msra.mxu0 0
    %370 = vmatprep.subr.bf16.mxu0 0
    %371 = vmatpush2.bf16.msra.mxu0 0
    %372 = vmatprep.subr.bf16.mxu0 0
    %373 = vmatpush2.bf16.msra.mxu0 0
    %374 = vmatprep.subr.bf16.mxu0 0
    %375 = vmatpush2.bf16.msra.mxu0 0
    %376 = vmatprep.mubr.bf16.mxu0 0
    %377 = vmatmul.mubr.bf16.gmra.mxu0 %v153
    %v378 = vpop.f32.mrf.mxu0
    %v379 = vadd.f32 %v339, %v378
    %v380 = vpop.f32.mrf.mxu0
    %v381 = vpop.f32.mrf.mxu0
    %v382 = vpop.f32.mrf.mxu0
    %383 = vdwg.mxu0
    %v384 = vmax.f32 %v379, 0.0
    %v385 = vld [vmem:[#allocation7] sm:$0xf]
    %v386 = vld [vmem:[#allocation7 + $0x4] sm:$0xf]
    %v387 = vld [vmem:[#allocation7 + $0x8] sm:$0xf]
    %v388 = vld [vmem:[#allocation7 + $0xc] sm:$0xf]
    %v389 = vld [vmem:[#allocation7 + $0x10] sm:$0xf]
    %v390 = vld [vmem:[#allocation7 + $0x14] sm:$0xf]
    %v391 = vld [vmem:[#allocation7 + $0x18] sm:$0xf]
    %v392 = vld [vmem:[#allocation7 + $0x1c] sm:$0xf]
    %v393 = vld [vmem:[#allocation7 + $0x20] sm:$0xf]
    %v394 = vld [vmem:[#allocation7 + $0x24] sm:$0xf]
    %v395 = vld [vmem:[#allocation7 + $0x28] sm:$0xf]
    %v396 = vld [vmem:[#allocation7 + $0x2c] sm:$0xf]
    %v397 = vld [vmem:[#allocation7 + $0x30] sm:$0xf]
    %v398 = vld [vmem:[#allocation7 + $0x34] sm:$0xf]
    %v399 = vld [vmem:[#allocation7 + $0x38] sm:$0xf]
    %v400 = vld [vmem:[#allocation7 + $0x3c] sm:$0xf]
    %v401 = vld [vmem:[%s4] sm:$0x1]
    %v402 = vpack.c.bf16 %v384, %v384
    %v404 = vlaneseq
    %v405 = vshrl.u32 %v404, 7
    %v406 = vsub.s32 0, %v405
    %v407 = vrot.slane %v401, %v406
    %v425 = vunpack.c.l.b16 %v385
    %v426 = vunpack.c.l.b16 %v386
    %v427 = vunpack.c.l.b16 %v387
    %v428 = vunpack.c.l.b16 %v388
    %v429 = vunpack.c.l.b16 %v389
    %v430 = vunpack.c.l.b16 %v390
    %v431 = vunpack.c.l.b16 %v391
    %v432 = vunpack.c.l.b16 %v392
    %v433 = vunpack.c.l.b16 %v393
    %v434 = vunpack.c.l.b16 %v394
    %v435 = vunpack.c.l.b16 %v395
    %v436 = vunpack.c.l.b16 %v396
    %v437 = vunpack.c.l.b16 %v397
    %v438 = vunpack.c.l.b16 %v398
    %v439 = vunpack.c.l.b16 %v399
    %v440 = vunpack.c.l.b16 %v400
    %v441 = vpack.c.b16 %v426, %v425
    %v442 = vpack.c.b16 %v428, %v427
    %v443 = vpack.c.b16 %v430, %v429
    %v444 = vpack.c.b16 %v432, %v431
    %v445 = vpack.c.b16 %v434, %v433
    %v446 = vpack.c.b16 %v436, %v435
    %v447 = vpack.c.b16 %v438, %v437
    %v448 = vpack.c.b16 %v440, %v439
    %457 = vmatprep.subr.bf16.mxu0 0
    %458 = vmatpush1.bf16.msra.mxu0 %v448
    %459 = vmatprep.subr.bf16.mxu0 0
    %460 = vmatpush1.bf16.msra.mxu0 %v447
    %461 = vmatprep.subr.bf16.mxu0 0
    %462 = vmatpush1.bf16.msra.mxu0 %v446
    %463 = vmatprep.subr.bf16.mxu0 0
    %464 = vmatpush1.bf16.msra.mxu0 %v445
    %465 = vmatprep.subr.bf16.mxu0 0
    %466 = vmatpush1.bf16.msra.mxu0 %v444
    %467 = vmatprep.subr.bf16.mxu0 0
    %468 = vmatpush1.bf16.msra.mxu0 %v443
    %469 = vmatprep.subr.bf16.mxu0 0
    %470 = vmatpush1.bf16.msra.mxu0 %v442
    %471 = vmatprep.subr.bf16.mxu0 0
    %472 = vmatpush1.bf16.msra.mxu0 %v441
    %473 = vmatprep.subr.bf16.mxu0 0
    %474 = vmatpush2.bf16.msra.mxu0 0
    %475 = vmatprep.subr.bf16.mxu0 0
    %476 = vmatpush2.bf16.msra.mxu0 0
    %477 = vmatprep.subr.bf16.mxu0 0
    %478 = vmatpush2.bf16.msra.mxu0 0
    %479 = vmatprep.subr.bf16.mxu0 0
    %480 = vmatpush2.bf16.msra.mxu0 0
    %481 = vmatprep.subr.bf16.mxu0 0
    %482 = vmatpush2.bf16.msra.mxu0 0
    %483 = vmatprep.subr.bf16.mxu0 0
    %484 = vmatpush2.bf16.msra.mxu0 0
    %485 = vmatprep.subr.bf16.mxu0 0
    %486 = vmatpush2.bf16.msra.mxu0 0
    %487 = vmatprep.subr.bf16.mxu0 0
    %488 = vmatpush2.bf16.msra.mxu0 0
    %489 = vmatprep.mubr.bf16.mxu0 0
    %490 = vmatmul.mubr.bf16.gmra.mxu0 %v402
    %v491 = vpop.f32.mrf.mxu0
    %v492 = vadd.f32 %v407, %v491
    %v493 = vpop.f32.mrf.mxu0
    %v494 = vpop.f32.mrf.mxu0
    %v495 = vpop.f32.mrf.mxu0
    %496 = vdwg.mxu0
    %v497 = vmax.f32 %v492, 0.0
    %v498 = vld [vmem:[#allocation8] sm:$0xf]
    %v499 = vld [vmem:[#allocation8 + $0x4] sm:$0xf]
    %v500 = vld [vmem:[#allocation8 + $0x8] sm:$0xf]
    %v501 = vld [vmem:[#allocation8 + $0xc] sm:$0xf]
    %v502 = vld [vmem:[#allocation8 + $0x10] sm:$0xf]
    %v503 = vld [vmem:[#allocation8 + $0x14] sm:$0xf]
    %v504 = vld [vmem:[#allocation8 + $0x18] sm:$0xf]
    %v505 = vld [vmem:[#allocation8 + $0x1c] sm:$0xf]
    %v506 = vld [vmem:[#allocation8 + $0x20] sm:$0xf]
    %v507 = vld [vmem:[#allocation8 + $0x24] sm:$0xf]
    %v508 = vld [vmem:[#allocation8 + $0x28] sm:$0xf]
    %v509 = vld [vmem:[#allocation8 + $0x2c] sm:$0xf]
    %v510 = vld [vmem:[#allocation8 + $0x30] sm:$0xf]
    %v511 = vld [vmem:[#allocation8 + $0x34] sm:$0xf]
    %v512 = vld [vmem:[#allocation8 + $0x38] sm:$0xf]
    %v513 = vld [vmem:[#allocation8 + $0x3c] sm:$0xf]
    %v514 = vld [vmem:[%s6] sm:$0x1]
    %v515 = vpack.c.bf16 %v497, %v497
    %v517 = vlaneseq
    %v518 = vshrl.u32 %v517, 7
    %v519 = vsub.s32 0, %v518
    %v520 = vrot.slane %v514, %v519
    %v538 = vunpack.c.l.b16 %v498
    %v539 = vunpack.c.l.b16 %v499
    %v540 = vunpack.c.l.b16 %v500
    %v541 = vunpack.c.l.b16 %v501
    %v542 = vunpack.c.l.b16 %v502
    %v543 = vunpack.c.l.b16 %v503
    %v544 = vunpack.c.l.b16 %v504
    %v545 = vunpack.c.l.b16 %v505
    %v546 = vunpack.c.l.b16 %v506
    %v547 = vunpack.c.l.b16 %v507
    %v548 = vunpack.c.l.b16 %v508
    %v549 = vunpack.c.l.b16 %v509
    %v550 = vunpack.c.l.b16 %v510
    %v551 = vunpack.c.l.b16 %v511
    %v552 = vunpack.c.l.b16 %v512
    %v553 = vunpack.c.l.b16 %v513
    %v554 = vpack.c.b16 %v539, %v538
    %v555 = vpack.c.b16 %v541, %v540
    %v556 = vpack.c.b16 %v543, %v542
    %v557 = vpack.c.b16 %v545, %v544
    %v558 = vpack.c.b16 %v547, %v546
    %v559 = vpack.c.b16 %v549, %v548
    %v560 = vpack.c.b16 %v551, %v550
    %v561 = vpack.c.b16 %v553, %v552
    %570 = vmatprep.subr.bf16.mxu0 0
    %571 = vmatpush1.bf16.msra.mxu0 %v561
    %572 = vmatprep.subr.bf16.mxu0 0
    %573 = vmatpush1.bf16.msra.mxu0 %v560
    %574 = vmatprep.subr.bf16.mxu0 0
    %575 = vmatpush1.bf16.msra.mxu0 %v559
    %576 = vmatprep.subr.bf16.mxu0 0
    %577 = vmatpush1.bf16.msra.mxu0 %v558
    %578 = vmatprep.subr.bf16.mxu0 0
    %579 = vmatpush1.bf16.msra.mxu0 %v557
    %580 = vmatprep.subr.bf16.mxu0 0
    %581 = vmatpush1.bf16.msra.mxu0 %v556
    %582 = vmatprep.subr.bf16.mxu0 0
    %583 = vmatpush1.bf16.msra.mxu0 %v555
    %584 = vmatprep.subr.bf16.mxu0 0
    %585 = vmatpush1.bf16.msra.mxu0 %v554
    %586 = vmatprep.subr.bf16.mxu0 0
    %587 = vmatpush2.bf16.msra.mxu0 0
    %588 = vmatprep.subr.bf16.mxu0 0
    %589 = vmatpush2.bf16.msra.mxu0 0
    %590 = vmatprep.subr.bf16.mxu0 0
    %591 = vmatpush2.bf16.msra.mxu0 0
    %592 = vmatprep.subr.bf16.mxu0 0
    %593 = vmatpush2.bf16.msra.mxu0 0
    %594 = vmatprep.subr.bf16.mxu0 0
    %595 = vmatpush2.bf16.msra.mxu0 0
    %596 = vmatprep.subr.bf16.mxu0 0
    %597 = vmatpush2.bf16.msra.mxu0 0
    %598 = vmatprep.subr.bf16.mxu0 0
    %599 = vmatpush2.bf16.msra.mxu0 0
    %600 = vmatprep.subr.bf16.mxu0 0
    %601 = vmatpush2.bf16.msra.mxu0 0
    %602 = vmatprep.mubr.bf16.mxu0 0
    %603 = vmatmul.mubr.bf16.gmra.mxu0 %v515
    %v604 = vpop.f32.mrf.mxu0
    %v605 = vadd.f32 %v520, %v604
    %v606 = vpop.f32.mrf.mxu0
    %v607 = vpop.f32.mrf.mxu0
    %v608 = vpop.f32.mrf.mxu0
    %609 = vdwg.mxu0
    %610 = vst [vmem:[#allocation10] sm:$0x3] %v605
    // Predicated region
    $region46: #{tpu_custom_call.1} parent=1 // pred_check
      _
    $region47: #{tpu_custom_call.1} parent=1 // pred_check_branch
      %612 = sbr.rel (0) target = $region49
    $region48: #{tpu_custom_call.1} parent=1 // pred_region
      %s614 = ssub.s32 32, 32
      %615 = vsyncadd [#allocation4], %s614
      %s617 = sshll.u32 [#allocation10], 4
      %s618 = int_to_ptr.vmem [resolvable:$true] %s617
      %620 = dma.vmem_to_hbm [thread:$0]  %s618, 32, %s7, [#allocation4]
    $region49: #{tpu_custom_call.1} parent=1 // pred_fallthru
      _
    // Predicated region
    $region50: #{tpu_custom_call.1} parent=1 // pred_check
      _
    $region51: #{tpu_custom_call.1} parent=1 // pred_check_branch
      %622 = sbr.rel (0) target = $region53
    $region52: #{tpu_custom_call.1} parent=1 // pred_region
      %623 = dma.done [#allocation4], 32
    $region53: #{tpu_custom_call.1} parent=1 // pred_fallthru
      _
    %624 = vsyncpa [#allocation3], 1
    %625 = vsyncpa [#allocation6], 1
    %626 = vsyncpa [#allocation9], 1
    %627 = vsyncpa [#allocation4], 1

// kernel: tpu_custom_call.1
$region0: #{tpu_custom_call.1}
  #allocation0 [shape = 'u32[]', space=smem, size = 0x4, offset = 0x4, fixed_abs, tag = 'smem constant byte address 0x4 - core index']
  #allocation1 [shape = 'u32[144,128]{1,0:T(1,128)}', space=vmem, size = 0x12000, scoped, tag = 'internal scratch']
  %s0 = inlined_call_operand.hbm [shape: f32[2,384], index: 0, kind: input, shape index: {}]
  %s1 = inlined_call_operand.hbm [shape: bf16[384,128], index: 1, kind: input, shape index: {}]
  %s2 = inlined_call_operand.vmem [shape: f32[1,128], index: 2, kind: input, shape index: {}]
  %s3 = inlined_call_operand.hbm [shape: bf16[128,128], index: 3, kind: input, shape index: {}]
  %s4 = inlined_call_operand.vmem [shape: f32[1,128], index: 4, kind: input, shape index: {}]
  %s5 = inlined_call_operand.hbm [shape: bf16[128,128], index: 5, kind: input, shape index: {}]
  %s6 = inlined_call_operand.vmem [shape: f32[1,128], index: 6, kind: input, shape index: {}]
  %s7 = inlined_call_operand.hbm [shape: f32[2,128], index: 7, kind: output, shape index: {}]
  %s8 = sld [smem:[#allocation0]]
  $region54: #{tpu_custom_call.1} parent=0
    _
  %s10 = ssub.s32 1, %s8
  %s11 = scalar_select 0, %s10, %s8
  $region1: #{tpu_custom_call.1} parent=0
    #allocation2 [shape = 'u8[3072]{0}', space=vmem, size = 0xc00, scoped, tag = 'input window, operand 0, single buffered']
    #allocation3 [shape = 's32[1]{0}', space=sflag, size = 0x4, scoped, tag = 'scoped memory for tpu_custom_call.1']
    #allocation4 [shape = 's32[1]{0}', space=sflag, size = 0x4, scoped, tag = 'scoped memory for tpu_custom_call.1']
    #allocation5 [shape = 'u8[98304]{0}', space=vmem, size = 0x18000, scoped, tag = 'input window, operand 1, single buffered']
    #allocation6 [shape = 's32[1]{0}', space=sflag, size = 0x4, scoped, tag = 'scoped memory for tpu_custom_call.1']
    #allocation7 [shape = 'u8[32768]{0}', space=vmem, size = 0x8000, scoped, tag = 'input window, operand 3, single buffered']
    #allocation8 [shape = 'u8[32768]{0}', space=vmem, size = 0x8000, scoped, tag = 'input window, operand 5, single buffered']
    #allocation9 [shape = 's32[1]{0}', space=sflag, size = 0x4, scoped, tag = 'scoped memory for tpu_custom_call.1']
    #allocation10 [shape = 'u8[1024]{0}', space=vmem, size = 0x400, scoped, tag = 'output window, operand 0, single buffered']
    %12 = vsyncpa [#allocation3], 0
    %13 = vsyncpa [#allocation6], 0
    %14 = vsyncpa [#allocation9], 0
    %15 = vsyncpa [#allocation4], 0
    // Predicated region
    $region2: #{tpu_custom_call.1} parent=1 // pred_check
      _
    $region3: #{tpu_custom_call.1} parent=1 // pred_check_branch
      %17 = sbr.rel (0) target = $region5
    $region4: #{tpu_custom_call.1} parent=1 // pred_region
      %s19 = ssub.s32 96, 96
      %20 = vsyncadd [#allocation3], %s19
      %s22 = sshll.u32 [#allocation2], 4
      %s23 = int_to_ptr.vmem [resolvable:$true] %s22
      %25 = dma.hbm_to_vmem [thread:$0]  %s0, 96, %s23, [#allocation3]
    $region5: #{tpu_custom_call.1} parent=1 // pred_fallthru
      _
    // Predicated region
    $region6: #{tpu_custom_call.1} parent=1 // pred_check
      _
    $region7: #{tpu_custom_call.1} parent=1 // pred_check_branch
      %27 = sbr.rel (0) target = $region9
    $region8: #{tpu_custom_call.1} parent=1 // pred_region
      %s29 = ssub.s32 3072, 3072
      %30 = vsyncadd [#allocation6], %s29
      %s31 = sshll.u32 [#allocation5], 4
      %s32 = int_to_ptr.vmem [resolvable:$true] %s31
      %37 = dma.hbm_to_vmem [thread:$0]  %s1, 3072, %s32, [#allocation6], 64, 64, 4
    $region9: #{tpu_custom_call.1} parent=1 // pred_fallthru
      _
    // Predicated region
    $region10: #{tpu_custom_call.1} parent=1 // pred_check
      _
    $region11: #{tpu_custom_call.1} parent=1 // pred_check_branch
      %39 = sbr.rel (0) target = $region13
    $region12: #{tpu_custom_call.1} parent=1 // pred_region
      _
    $region13: #{tpu_custom_call.1} parent=1 // pred_fallthru
      _
    // Predicated region
    $region14: #{tpu_custom_call.1} parent=1 // pred_check
      _
    $region15: #{tpu_custom_call.1} parent=1 // pred_check_branch
      %41 = sbr.rel (0) target = $region17
    $region16: #{tpu_custom_call.1} parent=1 // pred_region
      %s43 = ssub.s32 1024, 1024
      %44 = vsyncadd [#allocation6], %s43
      %s45 = sshll.u32 [#allocation7], 4
      %s46 = int_to_ptr.vmem [resolvable:$true] %s45
      %51 = dma.hbm_to_vmem [thread:$0]  %s3, 1024, %s46, [#allocation6], 64, 64, 4
    $region17: #{tpu_custom_call.1} parent=1 // pred_fallthru
      _
    // Predicated region
    $region18: #{tpu_custom_call.1} parent=1 // pred_check
      _
    $region19: #{tpu_custom_call.1} parent=1 // pred_check_branch
      %53 = sbr.rel (0) target = $region21
    $region20: #{tpu_custom_call.1} parent=1 // pred_region
      _
    $region21: #{tpu_custom_call.1} parent=1 // pred_fallthru
      _
    // Predicated region
    $region22: #{tpu_custom_call.1} parent=1 // pred_check
      _
    $region23: #{tpu_custom_call.1} parent=1 // pred_check_branch
      %55 = sbr.rel (0) target = $region25
    $region24: #{tpu_custom_call.1} parent=1 // pred_region
      %s57 = ssub.s32 1024, 1024
      %58 = vsyncadd [#allocation9], %s57
      %s59 = sshll.u32 [#allocation8], 4
      %s60 = int_to_ptr.vmem [resolvable:$true] %s59
      %65 = dma.hbm_to_vmem [thread:$0]  %s5, 1024, %s60, [#allocation9], 64, 64, 4
    $region25: #{tpu_custom_call.1} parent=1 // pred_fallthru
      _
    // Predicated region
    $region26: #{tpu_custom_call.1} parent=1 // pred_check
      _
    $region27: #{tpu_custom_call.1} parent=1 // pred_check_branch
      %67 = sbr.rel (0) target = $region29
    $region28: #{tpu_custom_call.1} parent=1 // pred_region
      _
    $region29: #{tpu_custom_call.1} parent=1 // pred_fallthru
      _
    // Predicated region
    $region30: #{tpu_custom_call.1} parent=1 // pred_check
      _
    $region31: #{tpu_custom_call.1} parent=1 // pred_check_branch
      %69 = sbr.rel (0) target = $region33
    $region32: #{tpu_custom_call.1} parent=1 // pred_region
      %70 = dma.done [#allocation3], 96
    $region33: #{tpu_custom_call.1} parent=1 // pred_fallthru
      _
    // Predicated region
    $region34: #{tpu_custom_call.1} parent=1 // pred_check
      _
    $region35: #{tpu_custom_call.1} parent=1 // pred_check_branch
      %72 = sbr.rel (0) target = $region37
    $region36: #{tpu_custom_call.1} parent=1 // pred_region
      %73 = dma.done [#allocation6], 3072
    $region37: #{tpu_custom_call.1} parent=1 // pred_fallthru
      _
    // Predicated region
    $region38: #{tpu_custom_call.1} parent=1 // pred_check
      _
    $region39: #{tpu_custom_call.1} parent=1 // pred_check_branch
      %75 = sbr.rel (0) target = $region41
    $region40: #{tpu_custom_call.1} parent=1 // pred_region
      %76 = dma.done [#allocation6], 1024
    $region41: #{tpu_custom_call.1} parent=1 // pred_fallthru
      _
    // Predicated region
    $region42: #{tpu_custom_call.1} parent=1 // pred_check
      _
    $region43: #{tpu_custom_call.1} parent=1 // pred_check_branch
      %78 = sbr.rel (0) target = $region45
    $region44: #{tpu_custom_call.1} parent=1 // pred_region
      %79 = dma.done [#allocation9], 1024
    $region45: #{tpu_custom_call.1} parent=1 // pred_fallthru
      _
    %v81 = vld [vmem:[#allocation2] sm:$0x3f]
    %v82 = vld [vmem:[#allocation5] sm:$0xf]
    %v83 = vld [vmem:[#allocation5 + $0x4] sm:$0xf]
    %v84 = vld [vmem:[#allocation5 + $0x8] sm:$0xf]
    %v85 = vld [vmem:[#allocation5 + $0xc] sm:$0xf]
    %v86 = vld [vmem:[#allocation5 + $0x10] sm:$0xf]
    %v87 = vld [vmem:[#allocation5 + $0x14] sm:$0xf]
    %v88 = vld [vmem:[#allocation5 + $0x18] sm:$0xf]
    %v89 = vld [vmem:[#allocation5 + $0x1c] sm:$0xf]
    %v90 = vld [vmem:[#allocation5 + $0x20] sm:$0xf]
    %v91 = vld [vmem:[#allocation5 + $0x24] sm:$0xf]
    %v92 = vld [vmem:[#allocation5 + $0x28] sm:$0xf]
    %v93 = vld [vmem:[#allocation5 + $0x2c] sm:$0xf]
    %v94 = vld [vmem:[#allocation5 + $0x30] sm:$0xf]
    %v95 = vld [vmem:[#allocation5 + $0x34] sm:$0xf]
    %v96 = vld [vmem:[#allocation5 + $0x38] sm:$0xf]
    %v97 = vld [vmem:[#allocation5 + $0x3c] sm:$0xf]
    %v98 = vld [vmem:[#allocation5 + $0x40] sm:$0xf]
    %v99 = vld [vmem:[#allocation5 + $0x44] sm:$0xf]
    %v100 = vld [vmem:[#allocation5 + $0x48] sm:$0xf]
    %v101 = vld [vmem:[#allocation5 + $0x4c] sm:$0xf]
    %v102 = vld [vmem:[#allocation5 + $0x50] sm:$0xf]
    %v103 = vld [vmem:[#allocation5 + $0x54] sm:$0xf]
    %v104 = vld [vmem:[#allocation5 + $0x58] sm:$0xf]
    %v105 = vld [vmem:[#allocation5 + $0x5c] sm:$0xf]
    %v106 = vld [vmem:[#allocation5 + $0x60] sm:$0xf]
    %v107 = vld [vmem:[#allocation5 + $0x64] sm:$0xf]
    %v108 = vld [vmem:[#allocation5 + $0x68] sm:$0xf]
    %v109 = vld [vmem:[#allocation5 + $0x6c] sm:$0xf]
    %v110 = vld [vmem:[#allocation5 + $0x70] sm:$0xf]
    %v111 = vld [vmem:[#allocation5 + $0x74] sm:$0xf]
    %v112 = vld [vmem:[#allocation5 + $0x78] sm:$0xf]
    %v113 = vld [vmem:[#allocation5 + $0x7c] sm:$0xf]
    %v114 = vld [vmem:[#allocation5 + $0x80] sm:$0xf]
    %v115 = vld [vmem:[#allocation5 + $0x84] sm:$0xf]
    %v116 = vld [vmem:[#allocation5 + $0x88] sm:$0xf]
    %v117 = vld [vmem:[#allocation5 + $0x8c] sm:$0xf]
    %v118 = vld [vmem:[#allocation5 + $0x90] sm:$0xf]
    %v119 = vld [vmem:[#allocation5 + $0x94] sm:$0xf]
    %v120 = vld [vmem:[#allocation5 + $0x98] sm:$0xf]
    %v121 = vld [vmem:[#allocation5 + $0x9c] sm:$0xf]
    %v122 = vld [vmem:[#allocation5 + $0xa0] sm:$0xf]
    %v123 = vld [vmem:[#allocation5 + $0xa4] sm:$0xf]
    %v124 = vld [vmem:[#allocation5 + $0xa8] sm:$0xf]
    %v125 = vld [vmem:[#allocation5 + $0xac] sm:$0xf]
    %v126 = vld [vmem:[#allocation5 + $0xb0] sm:$0xf]
    %v127 = vld [vmem:[#allocation5 + $0xb4] sm:$0xf]
    %v128 = vld [vmem:[#allocation5 + $0xb8] sm:$0xf]
    %v129 = vld [vmem:[#allocation5 + $0xbc] sm:$0xf]
    %v130 = vld [vmem:[%s2] sm:$0x1]
    %v132 = vcombine.high %v81, %v81
    %v134 = vunpack.c.l.s4 1983009808
    %v135 = vunpack.c.0.s8 %v134
    %v136 = vlaneseq
    %v137 = vshrl.u32 %v136, 7
    %v138 = vsub.s32 %v135, %v137
    %v139 = vrot.slane %v81, %v138
    %v141 = vunpack.c.l.s4 1983009808
    %v142 = vunpack.c.0.s8 %v141
    %v143 = vlaneseq
    %v144 = vshrl.u32 %v143, 7
    %v145 = vsub.s32 %v142, %v144
    %v146 = vrot.slane %v132, %v145
    %v147 = vcombine.high %v139, %v139
    %v151 = vpack.c.bf16 %v139, %v139
    %v152 = vpack.c.bf16 %v147, %v147
    %v153 = vpack.c.bf16 %v146, %v146
    %v155 = vlaneseq
    %v156 = vshrl.u32 %v155, 7
    %v157 = vsub.s32 0, %v156
    %v158 = vrot.slane %v130, %v157
    %v208 = vunpack.c.l.b16 %v82
    %v209 = vunpack.c.l.b16 %v83
    %v210 = vunpack.c.l.b16 %v84
    %v211 = vunpack.c.l.b16 %v85
    %v212 = vunpack.c.l.b16 %v86
    %v213 = vunpack.c.l.b16 %v87
    %v214 = vunpack.c.l.b16 %v88
    %v215 = vunpack.c.l.b16 %v89
    %v216 = vunpack.c.l.b16 %v90
    %v217 = vunpack.c.l.b16 %v91
    %v218 = vunpack.c.l.b16 %v92
    %v219 = vunpack.c.l.b16 %v93
    %v220 = vunpack.c.l.b16 %v94
    %v221 = vunpack.c.l.b16 %v95
    %v222 = vunpack.c.l.b16 %v96
    %v223 = vunpack.c.l.b16 %v97
    %v224 = vunpack.c.l.b16 %v98
    %v225 = vunpack.c.l.b16 %v99
    %v226 = vunpack.c.l.b16 %v100
    %v227 = vunpack.c.l.b16 %v101
    %v228 = vunpack.c.l.b16 %v102
    %v229 = vunpack.c.l.b16 %v103
    %v230 = vunpack.c.l.b16 %v104
    %v231 = vunpack.c.l.b16 %v105
    %v232 = vunpack.c.l.b16 %v106
    %v233 = vunpack.c.l.b16 %v107
    %v234 = vunpack.c.l.b16 %v108
    %v235 = vunpack.c.l.b16 %v109
    %v236 = vunpack.c.l.b16 %v110
    %v237 = vunpack.c.l.b16 %v111
    %v238 = vunpack.c.l.b16 %v112
    %v239 = vunpack.c.l.b16 %v113
    %v240 = vunpack.c.l.b16 %v114
    %v241 = vunpack.c.l.b16 %v115
    %v242 = vunpack.c.l.b16 %v116
    %v243 = vunpack.c.l.b16 %v117
    %v244 = vunpack.c.l.b16 %v118
    %v245 = vunpack.c.l.b16 %v119
    %v246 = vunpack.c.l.b16 %v120
    %v247 = vunpack.c.l.b16 %v121
    %v248 = vunpack.c.l.b16 %v122
    %v249 = vunpack.c.l.b16 %v123
    %v250 = vunpack.c.l.b16 %v124
    %v251 = vunpack.c.l.b16 %v125
    %v252 = vunpack.c.l.b16 %v126
    %v253 = vunpack.c.l.b16 %v127
    %v254 = vunpack.c.l.b16 %v128
    %v255 = vunpack.c.l.b16 %v129
    %v256 = vpack.c.b16 %v209, %v208
    %v257 = vpack.c.b16 %v211, %v210
    %v258 = vpack.c.b16 %v213, %v212
    %v259 = vpack.c.b16 %v215, %v214
    %v260 = vpack.c.b16 %v217, %v216
    %v261 = vpack.c.b16 %v219, %v218
    %v262 = vpack.c.b16 %v221, %v220
    %v263 = vpack.c.b16 %v223, %v222
    %v264 = vpack.c.b16 %v225, %v224
    %v265 = vpack.c.b16 %v227, %v226
    %v266 = vpack.c.b16 %v229, %v228
    %v267 = vpack.c.b16 %v231, %v230
    %v268 = vpack.c.b16 %v233, %v232
    %v269 = vpack.c.b16 %v235, %v234
    %v270 = vpack.c.b16 %v237, %v236
    %v271 = vpack.c.b16 %v239, %v238
    %v272 = vpack.c.b16 %v241, %v240
    %v273 = vpack.c.b16 %v243, %v242
    %v274 = vpack.c.b16 %v245, %v244
    %v275 = vpack.c.b16 %v247, %v246
    %v276 = vpack.c.b16 %v249, %v248
    %v277 = vpack.c.b16 %v251, %v250
    %v278 = vpack.c.b16 %v253, %v252
    %v279 = vpack.c.b16 %v255, %v254
    %304 = vmatprep.subr.bf16.mxu0 0
    %305 = vmatpush1.bf16.msra.mxu0 %v263
    %306 = vmatprep.subr.bf16.mxu0 0
    %307 = vmatpush1.bf16.msra.mxu0 %v262
    %308 = vmatprep.subr.bf16.mxu0 0
    %309 = vmatpush1.bf16.msra.mxu0 %v261
    %310 = vmatprep.subr.bf16.mxu0 0
    %311 = vmatpush1.bf16.msra.mxu0 %v260
    %312 = vmatprep.subr.bf16.mxu0 0
    %313 = vmatpush1.bf16.msra.mxu0 %v259
    %314 = vmatprep.subr.bf16.mxu0 0
    %315 = vmatpush1.bf16.msra.mxu0 %v258
    %316 = vmatprep.subr.bf16.mxu0 0
    %317 = vmatpush1.bf16.msra.mxu0 %v257
    %318 = vmatprep.subr.bf16.mxu0 0
    %319 = vmatpush1.bf16.msra.mxu0 %v256
    %320 = vmatprep.subr.bf16.mxu0 0
    %321 = vmatpush2.bf16.msra.mxu0 %v271
    %322 = vmatprep.subr.bf16.mxu0 0
    %323 = vmatpush2.bf16.msra.mxu0 %v270
    %324 = vmatprep.subr.bf16.mxu0 0
    %325 = vmatpush2.bf16.msra.mxu0 %v269
    %326 = vmatprep.subr.bf16.mxu0 0
    %327 = vmatpush2.bf16.msra.mxu0 %v268
    %328 = vmatprep.subr.bf16.mxu0 0
    %329 = vmatpush2.bf16.msra.mxu0 %v267
    %330 = vmatprep.subr.bf16.mxu0 0
    %331 = vmatpush2.bf16.msra.mxu0 %v266
    %332 = vmatprep.subr.bf16.mxu0 0
    %333 = vmatpush2.bf16.msra.mxu0 %v265
    %334 = vmatprep.subr.bf16.mxu0 0
    %335 = vmatpush2.bf16.msra.mxu0 %v264
    %336 = vmatprep.mubr.bf16.mxu0 %v152
    %337 = vmatmul.mubr.bf16.gmra.mxu0 %v151
    %v338 = vpop.f32.mrf.mxu0
    %v339 = vadd.f32 %v158, %v338
    %v340 = vpop.f32.mrf.mxu0
    %v341 = vpop.f32.mrf.mxu0
    %v342 = vpop.f32.mrf.mxu0
    %343 = vdwg.mxu0
    %344 = vmatprep.subr.bf16.mxu0 0
    %345 = vmatpush1.bf16.msra.mxu0 %v279
    %346 = vmatprep.subr.bf16.mxu0 0
    %347 = vmatpush1.bf16.msra.mxu0 %v278
    %348 = vmatprep.subr.bf16.mxu0 0
    %349 = vmatpush1.bf16.msra.mxu0 %v277
    %350 = vmatprep.subr.bf16.mxu0 0
    %351 = vmatpush1.bf16.msra.mxu0 %v276
    %352 = vmatprep.subr.bf16.mxu0 0
    %353 = vmatpush1.bf16.msra.mxu0 %v275
    %354 = vmatprep.subr.bf16.mxu0 0
    %355 = vmatpush1.bf16.msra.mxu0 %v274
    %356 = vmatprep.subr.bf16.mxu0 0
    %357 = vmatpush1.bf16.msra.mxu0 %v273
    %358 = vmatprep.subr.bf16.mxu0 0
    %359 = vmatpush1.bf16.msra.mxu0 %v272
    %360 = vmatprep.subr.bf16.mxu0 0
    %361 = vmatpush2.bf16.msra.mxu0 0
    %362 = vmatprep.subr.bf16.mxu0 0
    %363 = vmatpush2.bf16.msra.mxu0 0
    %364 = vmatprep.subr.bf16.mxu0 0
    %365 = vmatpush2.bf16.msra.mxu0 0
    %366 = vmatprep.subr.bf16.mxu0 0
    %367 = vmatpush2.bf16.msra.mxu0 0
    %368 = vmatprep.subr.bf16.mxu0 0
    %369 = vmatpush2.bf16.msra.mxu0 0
    %370 = vmatprep.subr.bf16.mxu0 0
    %371 = vmatpush2.bf16.msra.mxu0 0
    %372 = vmatprep.subr.bf16.mxu0 0
    %373 = vmatpush2.bf16.msra.mxu0 0
    %374 = vmatprep.subr.bf16.mxu0 0
    %375 = vmatpush2.bf16.msra.mxu0 0
    %376 = vmatprep.mubr.bf16.mxu0 0
    %377 = vmatmul.mubr.bf16.gmra.mxu0 %v153
    %v378 = vpop.f32.mrf.mxu0
    %v379 = vadd.f32 %v339, %v378
    %v380 = vpop.f32.mrf.mxu0
    %v381 = vpop.f32.mrf.mxu0
    %v382 = vpop.f32.mrf.mxu0
    %383 = vdwg.mxu0
    %v384 = vmax.f32 %v379, 0.0
    %v385 = vld [vmem:[#allocation7] sm:$0xf]
    %v386 = vld [vmem:[#allocation7 + $0x4] sm:$0xf]
    %v387 = vld [vmem:[#allocation7 + $0x8] sm:$0xf]
    %v388 = vld [vmem:[#allocation7 + $0xc] sm:$0xf]
    %v389 = vld [vmem:[#allocation7 + $0x10] sm:$0xf]
    %v390 = vld [vmem:[#allocation7 + $0x14] sm:$0xf]
    %v391 = vld [vmem:[#allocation7 + $0x18] sm:$0xf]
    %v392 = vld [vmem:[#allocation7 + $0x1c] sm:$0xf]
    %v393 = vld [vmem:[#allocation7 + $0x20] sm:$0xf]
    %v394 = vld [vmem:[#allocation7 + $0x24] sm:$0xf]
    %v395 = vld [vmem:[#allocation7 + $0x28] sm:$0xf]
    %v396 = vld [vmem:[#allocation7 + $0x2c] sm:$0xf]
    %v397 = vld [vmem:[#allocation7 + $0x30] sm:$0xf]
    %v398 = vld [vmem:[#allocation7 + $0x34] sm:$0xf]
    %v399 = vld [vmem:[#allocation7 + $0x38] sm:$0xf]
    %v400 = vld [vmem:[#allocation7 + $0x3c] sm:$0xf]
    %v401 = vld [vmem:[%s4] sm:$0x1]
    %v402 = vpack.c.bf16 %v384, %v384
    %v404 = vlaneseq
    %v405 = vshrl.u32 %v404, 7
    %v406 = vsub.s32 0, %v405
    %v407 = vrot.slane %v401, %v406
    %v425 = vunpack.c.l.b16 %v385
    %v426 = vunpack.c.l.b16 %v386
    %v427 = vunpack.c.l.b16 %v387
    %v428 = vunpack.c.l.b16 %v388
    %v429 = vunpack.c.l.b16 %v389
    %v430 = vunpack.c.l.b16 %v390
    %v431 = vunpack.c.l.b16 %v391
    %v432 = vunpack.c.l.b16 %v392
    %v433 = vunpack.c.l.b16 %v393
    %v434 = vunpack.c.l.b16 %v394
    %v435 = vunpack.c.l.b16 %v395
    %v436 = vunpack.c.l.b16 %v396
    %v437 = vunpack.c.l.b16 %v397
    %v438 = vunpack.c.l.b16 %v398
    %v439 = vunpack.c.l.b16 %v399
    %v440 = vunpack.c.l.b16 %v400
    %v441 = vpack.c.b16 %v426, %v425
    %v442 = vpack.c.b16 %v428, %v427
    %v443 = vpack.c.b16 %v430, %v429
    %v444 = vpack.c.b16 %v432, %v431
    %v445 = vpack.c.b16 %v434, %v433
    %v446 = vpack.c.b16 %v436, %v435
    %v447 = vpack.c.b16 %v438, %v437
    %v448 = vpack.c.b16 %v440, %v439
    %457 = vmatprep.subr.bf16.mxu0 0
    %458 = vmatpush1.bf16.msra.mxu0 %v448
    %459 = vmatprep.subr.bf16.mxu0 0
    %460 = vmatpush1.bf16.msra.mxu0 %v447
    %461 = vmatprep.subr.bf16.mxu0 0
    %462 = vmatpush1.bf16.msra.mxu0 %v446
    %463 = vmatprep.subr.bf16.mxu0 0
    %464 = vmatpush1.bf16.msra.mxu0 %v445
    %465 = vmatprep.subr.bf16.mxu0 0
    %466 = vmatpush1.bf16.msra.mxu0 %v444
    %467 = vmatprep.subr.bf16.mxu0 0
    %468 = vmatpush1.bf16.msra.mxu0 %v443
    %469 = vmatprep.subr.bf16.mxu0 0
    %470 = vmatpush1.bf16.msra.mxu0 %v442
    %471 = vmatprep.subr.bf16.mxu0 0
    %472 = vmatpush1.bf16.msra.mxu0 %v441
    %473 = vmatprep.subr.bf16.mxu0 0
    %474 = vmatpush2.bf16.msra.mxu0 0
    %475 = vmatprep.subr.bf16.mxu0 0
    %476 = vmatpush2.bf16.msra.mxu0 0
    %477 = vmatprep.subr.bf16.mxu0 0
    %478 = vmatpush2.bf16.msra.mxu0 0
    %479 = vmatprep.subr.bf16.mxu0 0
    %480 = vmatpush2.bf16.msra.mxu0 0
    %481 = vmatprep.subr.bf16.mxu0 0
    %482 = vmatpush2.bf16.msra.mxu0 0
    %483 = vmatprep.subr.bf16.mxu0 0
    %484 = vmatpush2.bf16.msra.mxu0 0
    %485 = vmatprep.subr.bf16.mxu0 0
    %486 = vmatpush2.bf16.msra.mxu0 0
    %487 = vmatprep.subr.bf16.mxu0 0
    %488 = vmatpush2.bf16.msra.mxu0 0
    %489 = vmatprep.mubr.bf16.mxu0 0
    %490 = vmatmul.mubr.bf16.gmra.mxu0 %v402
    %v491 = vpop.f32.mrf.mxu0
    %v492 = vadd.f32 %v407, %v491
    %v493 = vpop.f32.mrf.mxu0
    %v494 = vpop.f32.mrf.mxu0
    %v495 = vpop.f32.mrf.mxu0
    %496 = vdwg.mxu0
    %v497 = vmax.f32 %v492, 0.0
    %v498 = vld [vmem:[#allocation8] sm:$0xf]
    %v499 = vld [vmem:[#allocation8 + $0x4] sm:$0xf]
    %v500 = vld [vmem:[#allocation8 + $0x8] sm:$0xf]
    %v501 = vld [vmem:[#allocation8 + $0xc] sm:$0xf]
    %v502 = vld [vmem:[#allocation8 + $0x10] sm:$0xf]
    %v503 = vld [vmem:[#allocation8 + $0x14] sm:$0xf]
    %v504 = vld [vmem:[#allocation8 + $0x18] sm:$0xf]
    %v505 = vld [vmem:[#allocation8 + $0x1c] sm:$0xf]
    %v506 = vld [vmem:[#allocation8 + $0x20] sm:$0xf]
    %v507 = vld [vmem:[#allocation8 + $0x24] sm:$0xf]
    %v508 = vld [vmem:[#allocation8 + $0x28] sm:$0xf]
    %v509 = vld [vmem:[#allocation8 + $0x2c] sm:$0xf]
    %v510 = vld [vmem:[#allocation8 + $0x30] sm:$0xf]
    %v511 = vld [vmem:[#allocation8 + $0x34] sm:$0xf]
    %v512 = vld [vmem:[#allocation8 + $0x38] sm:$0xf]
    %v513 = vld [vmem:[#allocation8 + $0x3c] sm:$0xf]
    %v514 = vld [vmem:[%s6] sm:$0x1]
    %v515 = vpack.c.bf16 %v497, %v497
    %v517 = vlaneseq
    %v518 = vshrl.u32 %v517, 7
    %v519 = vsub.s32 0, %v518
    %v520 = vrot.slane %v514, %v519
    %v538 = vunpack.c.l.b16 %v498
    %v539 = vunpack.c.l.b16 %v499
    %v540 = vunpack.c.l.b16 %v500
    %v541 = vunpack.c.l.b16 %v501
    %v542 = vunpack.c.l.b16 %v502
    %v543 = vunpack.c.l.b16 %v503
    %v544 = vunpack.c.l.b16 %v504
    %v545 = vunpack.c.l.b16 %v505
    %v546 = vunpack.c.l.b16 %v506
    %v547 = vunpack.c.l.b16 %v507
    %v548 = vunpack.c.l.b16 %v508
    %v549 = vunpack.c.l.b16 %v509
    %v550 = vunpack.c.l.b16 %v510
    %v551 = vunpack.c.l.b16 %v511
    %v552 = vunpack.c.l.b16 %v512
    %v553 = vunpack.c.l.b16 %v513
    %v554 = vpack.c.b16 %v539, %v538
    %v555 = vpack.c.b16 %v541, %v540
    %v556 = vpack.c.b16 %v543, %v542
    %v557 = vpack.c.b16 %v545, %v544
    %v558 = vpack.c.b16 %v547, %v546
    %v559 = vpack.c.b16 %v549, %v548
    %v560 = vpack.c.b16 %v551, %v550
    %v561 = vpack.c.b16 %v553, %v552
    %570 = vmatprep.subr.bf16.mxu0 0
    %571 = vmatpush1.bf16.msra.mxu0 %v561
    %572 = vmatprep.subr.bf16.mxu0 0
    %573 = vmatpush1.bf16.msra.mxu0 %v560
    %574 = vmatprep.subr.bf16.mxu0 0
    %575 = vmatpush1.bf16.msra.mxu0 %v559
    %576 = vmatprep.subr.bf16.mxu0 0
    %577 = vmatpush1.bf16.msra.mxu0 %v558
    %578 = vmatprep.subr.bf16.mxu0 0
    %579 = vmatpush1.bf16.msra.mxu0 %v557
    %580 = vmatprep.subr.bf16.mxu0 0
    %581 = vmatpush1.bf16.msra.mxu0 %v556
    %582 = vmatprep.subr.bf16.mxu0 0
    %583 = vmatpush1.bf16.msra.mxu0 %v555
    %584 = vmatprep.subr.bf16.mxu0 0
    %585 = vmatpush1.bf16.msra.mxu0 %v554
    %586 = vmatprep.subr.bf16.mxu0 0
    %587 = vmatpush2.bf16.msra.mxu0 0
    %588 = vmatprep.subr.bf16.mxu0 0
    %589 = vmatpush2.bf16.msra.mxu0 0
    %590 = vmatprep.subr.bf16.mxu0 0
    %591 = vmatpush2.bf16.msra.mxu0 0
    %592 = vmatprep.subr.bf16.mxu0 0
    %593 = vmatpush2.bf16.msra.mxu0 0
    %594 = vmatprep.subr.bf16.mxu0 0
    %595 = vmatpush2.bf16.msra.mxu0 0
    %596 = vmatprep.subr.bf16.mxu0 0
    %597 = vmatpush2.bf16.msra.mxu0 0
    %598 = vmatprep.subr.bf16.mxu0 0
    %599 = vmatpush2.bf16.msra.mxu0 0
    %600 = vmatprep.subr.bf16.mxu0 0
    %601 = vmatpush2.bf16.msra.mxu0 0
    %602 = vmatprep.mubr.bf16.mxu0 0
    %603 = vmatmul.mubr.bf16.gmra.mxu0 %v515
    %v604 = vpop.f32.mrf.mxu0
    %v605 = vadd.f32 %v520, %v604
    %v606 = vpop.f32.mrf.mxu0
    %v607 = vpop.f32.mrf.mxu0
    %v608 = vpop.f32.mrf.mxu0
    %609 = vdwg.mxu0
    %610 = vst [vmem:[#allocation10] sm:$0x3] %v605
    // Predicated region
    $region46: #{tpu_custom_call.1} parent=1 // pred_check
      _
    $region47: #{tpu_custom_call.1} parent=1 // pred_check_branch
      %612 = sbr.rel (0) target = $region49
    $region48: #{tpu_custom_call.1} parent=1 // pred_region
      %s614 = ssub.s32 32, 32
      %615 = vsyncadd [#allocation4], %s614
      %s617 = sshll.u32 [#allocation10], 4
      %s618 = int_to_ptr.vmem [resolvable:$true] %s617
      %620 = dma.vmem_to_hbm [thread:$0]  %s618, 32, %s7, [#allocation4]
    $region49: #{tpu_custom_call.1} parent=1 // pred_fallthru
      _
    // Predicated region
    $region50: #{tpu_custom_call.1} parent=1 // pred_check
      _
    $region51: #{tpu_custom_call.1} parent=1 // pred_check_branch
      %622 = sbr.rel (0) target = $region53
    $region52: #{tpu_custom_call.1} parent=1 // pred_region
      %623 = dma.done [#allocation4], 32
    $region53: #{tpu_custom_call.1} parent=1 // pred_fallthru
      _
    %624 = vsyncpa [#allocation3], 1
    %625 = vsyncpa [#allocation6], 1
    %626 = vsyncpa [#allocation9], 1
    %627 = vsyncpa [#allocation4], 1

</llo_original>
